<compile_context>
chip_gen: v6e
topology: v6e:2x2x1
jax: 0.10.0
libtpu: 0.0.40
codegen_flags: <defaults>
</compile_context>

<pallas_src>
import functools

import jax
import jax.numpy as jnp
from jax import lax
from jax.experimental import pallas as pl
from jax.experimental.pallas import tpu as pltpu


_VMEM_LIMIT_BYTES = 48 * 1024 * 1024            # <= 64 MiB phys on v7x; plenty on v5e/v6e
_DEFAULT_TILE_BYTES = _VMEM_LIMIT_BYTES // 6    # ~8 MiB/tile; in+out double-buffered ~32 MiB
_MIN_GRID_STEPS = 8                             # keep the pipeline / megacore busy


def _compiler_params(dims):
    return pltpu.CompilerParams(
        dimension_semantics=dims,
        vmem_limit_bytes=_VMEM_LIMIT_BYTES,
    )


def _round_up(v, m):
    return -(-v // m) * m


def _sublane_multiple(dtype):
    # Sublane packing: 8 rows for 32-bit, 16 for bf16/f16, 32 for 8-bit.
    itemsize = jnp.dtype(dtype).itemsize
    return max(8, 32 // max(itemsize, 1))


def _block_rows(rows, row_bytes, tile_bytes, mult, min_steps=_MIN_GRID_STEPS):
    """Rows per tile: byte budget, rounded to the sublane multiple.

    If the whole array fits in one tile, split into ~min_steps grid steps so
    the DMA pipeline (and v7x's two TensorCores) still have work to overlap.
    """
    br = tile_bytes // max(row_bytes, 1)
    if br >= rows:
        br = -(-rows // min_steps)
    br = max(mult, (br // mult) * mult)
    if br >= rows:
        return rows
    return br


# ----------------------------------------------------------------------------
# Kernels
# ----------------------------------------------------------------------------
def _ln_rows_kernel(x_ref, w_ref, b_ref, o_ref, *, eps, inv_c):
    # x_ref: (bm, C), w_ref/b_ref: (1, C). Reduce over the lane (C) axis.
    x = x_ref[...].astype(jnp.float32)
    mean = jnp.sum(x, axis=-1, keepdims=True) * inv_c
    xc = x - mean
    var = jnp.sum(xc * xc, axis=-1, keepdims=True) * inv_c   # biased variance
    inv = lax.rsqrt(var + eps)
    w = w_ref[...].astype(jnp.float32)
    b = b_ref[...].astype(jnp.float32)
    o_ref[...] = (xc * inv * w + b).astype(o_ref.dtype)


def _ln_packed_kernel(x_ref, m_ref, w_ref, b_ref, o_ref, *, eps, inv_c):
    # x_ref: (bm, P) with g = P // C groups of C per lane-row (lane-dense).
    # m_ref: (P, P) block-diagonal ones; x @ m broadcasts each group-sum.
    # Precision.HIGH (3 bf16 passes) keeps the MXU off the critical path on
    # v5e while staying fp32-class accurate for the centered variance.
    x = x_ref[...].astype(jnp.float32)
    m = m_ref[...]
    mean = jnp.dot(x, m, preferred_element_type=jnp.float32,
                   precision=lax.Precision.HIGH) * inv_c
    xc = x - mean
    var = jnp.dot(xc * xc, m, preferred_element_type=jnp.float32,
                  precision=lax.Precision.HIGH) * inv_c
    inv = lax.rsqrt(var + eps)
    o_ref[...] = (xc * inv * w_ref[...] + b_ref[...]).astype(o_ref.dtype)


def _ln_cf_kernel(x_ref, w_ref, b_ref, o_ref, *, eps, inv_c):
    # x_ref: (bn, C, bl) -- C on sublanes, spatial lane-dense.
    # w_ref/b_ref: (1, C, 1). Reduce over the C (sublane) axis.
    x = x_ref[...].astype(jnp.float32)
    mean = jnp.sum(x, axis=1, keepdims=True) * inv_c
    xc = x - mean
    var = jnp.sum(xc * xc, axis=1, keepdims=True) * inv_c    # biased variance
    inv = lax.rsqrt(var + eps)
    o_ref[...] = (xc * inv * w_ref[...] + b_ref[...]).astype(o_ref.dtype)


# ----------------------------------------------------------------------------
# pallas_call wrappers
# ----------------------------------------------------------------------------
def _layernorm_rows(x2d, weight, bias, eps, tile_bytes):
    """LayerNorm over the last dim of a (rows, C) array (C on lanes)."""
    rows, c = x2d.shape
    dsize = x2d.dtype.itemsize
    smult = _sublane_multiple(x2d.dtype)
    c_pad = _round_up(c, 128)                       # lane padding for VMEM budget
    bm = _block_rows(rows, c_pad * dsize, tile_bytes, smult)
    grid = (pl.cdiv(rows, bm),)

    w2d = weight.reshape(1, c)
    b2d = bias.reshape(1, c)

    kernel = functools.partial(_ln_rows_kernel, eps=eps, inv_c=1.0 / c)
    return pl.pallas_call(
        kernel,
        out_shape=jax.ShapeDtypeStruct((rows, c), x2d.dtype),
        grid_spec=pltpu.PrefetchScalarGridSpec(
            num_scalar_prefetch=0,
            grid=grid,
            in_specs=[
                pl.BlockSpec((bm, c), lambda i: (i, 0)),
                pl.BlockSpec((1, c), lambda i: (0, 0)),
                pl.BlockSpec((1, c), lambda i: (0, 0)),
            ],
            out_specs=pl.BlockSpec((bm, c), lambda i: (i, 0)),
        ),
        compiler_params=_compiler_params(("parallel",)),
    )(x2d, w2d, b2d)


def _layernorm_rows_packed(x2d, weight, bias, eps, tile_bytes):
    """Small-C LayerNorm: pack g = 128//C rows per 128-lane row (lane-dense)."""
    rows, c = x2d.shape
    g = 128 // c
    p = g * c                      # = 128
    prows = rows // g
    xp = x2d.reshape(prows, p)

    dsize = x2d.dtype.itemsize
    smult = _sublane_multiple(x2d.dtype)
    bm = _block_rows(prows, p * dsize, tile_bytes, smult)
    grid = (pl.cdiv(prows, bm),)

    # Block-diagonal ones matrix: M[i, j] = 1 iff i//C == j//C.
    ridx = lax.broadcasted_iota(jnp.int32, (p, p), 0) // c
    cidx = lax.broadcasted_iota(jnp.int32, (p, p), 1) // c
    m = (ridx == cidx).astype(jnp.float32)

    wp = jnp.tile(weight.astype(jnp.float32), g).reshape(1, p)
    bp = jnp.tile(bias.astype(jnp.float32), g).reshape(1, p)

    kernel = functools.partial(_ln_packed_kernel, eps=eps, inv_c=1.0 / c)
    out = pl.pallas_call(
        kernel,
        out_shape=jax.ShapeDtypeStruct((prows, p), x2d.dtype),
        grid_spec=pltpu.PrefetchScalarGridSpec(
            num_scalar_prefetch=0,
            grid=grid,
            in_specs=[
                pl.BlockSpec((bm, p), lambda i: (i, 0)),
                pl.BlockSpec((p, p), lambda i: (0, 0)),
                pl.BlockSpec((1, p), lambda i: (0, 0)),
                pl.BlockSpec((1, p), lambda i: (0, 0)),
            ],
            out_specs=pl.BlockSpec((bm, p), lambda i: (i, 0)),
        ),
        compiler_params=_compiler_params(("parallel",)),
    )(xp, m, wp, bp)
    return out.reshape(rows, c)


def _layernorm_channels_first(x, weight, bias, eps, tile_bytes):
    """Native channels_first LayerNorm on NCHW (no transposes)."""
    n, c, h, w = x.shape
    hw = h * w
    x3 = x.reshape(n, c, hw)
    dsize = x.dtype.itemsize
    smult = _sublane_multiple(x.dtype)
    c_pad = _round_up(c, smult)                     # sublane padding for budget

    col_bytes = c_pad * dsize
    budget_cols = max(1, tile_bytes // max(col_bytes, 1))

    w3 = weight.astype(jnp.float32).reshape(1, c, 1)
    b3 = bias.astype(jnp.float32).reshape(1, c, 1)
    kernel = functools.partial(_ln_cf_kernel, eps=eps, inv_c=1.0 / c)

    if hw <= budget_cols:
        # Small spatial extent: keep the full H*W on the lane axis and block
        # several batch elements per grid step.  One masked lane-tail per
        # tile (when hw % 128 != 0) instead of tiny masked blocks per step.
        bl = hw
        bn = max(1, budget_cols // hw)
        bn = min(bn, max(1, -(-n // _MIN_GRID_STEPS)))   # keep ~>=8 grid steps
        bn = min(bn, n)
        grid = (pl.cdiv(n, bn),)
        in_specs = [
            pl.BlockSpec((bn, c, bl), lambda i: (i, 0, 0)),
            pl.BlockSpec((1, c, 1), lambda i: (0, 0, 0)),
            pl.BlockSpec((1, c, 1), lambda i: (0, 0, 0)),
        ]
        out_spec = pl.BlockSpec((bn, c, bl), lambda i: (i, 0, 0))
        dims = ("parallel",)
    else:
        # Large spatial extent: 128-multiple lane blocks, one batch per step.
        bl = max(128, (budget_cols // 128) * 128)
        grid = (n, pl.cdiv(hw, bl))
        in_specs = [
            pl.BlockSpec((1, c, bl), lambda i, j: (i, 0, j)),
            pl.BlockSpec((1, c, 1), lambda i, j: (0, 0, 0)),
            pl.BlockSpec((1, c, 1), lambda i, j: (0, 0, 0)),
        ]
        out_spec = pl.BlockSpec((1, c, bl), lambda i, j: (i, 0, j))
        dims = ("parallel", "parallel")

    out = pl.pallas_call(
        kernel,
        out_shape=jax.ShapeDtypeStruct((n, c, hw), x.dtype),
        grid_spec=pltpu.PrefetchScalarGridSpec(
            num_scalar_prefetch=0,
            grid=grid,
            in_specs=in_specs,
            out_specs=out_spec,
        ),
        compiler_params=_compiler_params(dims),
    )(x3, w3, b3)
    return out.reshape(n, c, h, w)


def layer_norm(x, weight, bias, eps=1e-5, data_format="channels_last",
               tile_bytes=_DEFAULT_TILE_BYTES):
    """Matches models/memory.py::LayerNorm.forward."""
    if data_format not in ("channels_last", "channels_first"):
        raise NotImplementedError

    if data_format == "channels_last":
        c = x.shape[-1]
        lead = x.shape[:-1]
        x2d = x.reshape(-1, c)
        rows = x2d.shape[0]
        if c < 128 and 128 % c == 0:
            g = 128 // c
            main = (rows // g) * g
            if main == rows:
                out = _layernorm_rows_packed(x2d, weight, bias, eps, tile_bytes)
            elif main > 0:
                # Keep the lane-dense packed path for the bulk; route only the
                # tiny (< g rows) remainder through the plain kernel.
                out_main = _layernorm_rows_packed(x2d[:main], weight, bias,
                                                  eps, tile_bytes)
                out_rem = _layernorm_rows(x2d[main:], weight, bias,
                                          eps, tile_bytes)
                out = jnp.concatenate([out_main, out_rem], axis=0)
            else:
                out = _layernorm_rows(x2d, weight, bias, eps, tile_bytes)
        else:
            out = _layernorm_rows(x2d, weight, bias, eps, tile_bytes)
        return out.reshape(*lead, c)
    else:
        if x.ndim != 4:
            raise NotImplementedError("channels_first expects NCHW input")
        return _layernorm_channels_first(x, weight, bias, eps, tile_bytes)


# ----------------------------------------------------------------------------
# Reference + tests
# ----------------------------------------------------------------------------
def _reference(x, weight, bias, eps, data_format):
    if data_format == "channels_last":
        u = jnp.mean(x, axis=-1, keepdims=True)
        s = jnp.mean((x - u) ** 2, axis=-1, keepdims=True)
        return (x - u) / jnp.sqrt(s + eps) * weight + bias
    else:
        u = jnp.mean(x, axis=1, keepdims=True)
        s = jnp.mean((x - u) ** 2, axis=1, keepdims=True)
        xn = (x - u) / jnp.sqrt(s + eps)
        return weight[:, None, None] * xn + bias[:, None, None]


if __name__ == "__main__":
    key = jax.random.PRNGKey(0)
    k1, k2, k3, k4, kw = jax.random.split(key, 5)
    eps = 1e-5
    atol = rtol = 3e-5

    # 1) channels_first: NCHW, C=4 (batched-batch-dim channels_first kernel).
    x_cf = jax.random.normal(k1, (2, 4, 16, 16), dtype=jnp.float32)
    w_cf = jax.random.normal(kw, (4,), dtype=jnp.float32)
    b_cf = jax.random.normal(k4, (4,), dtype=jnp.float32) * 0.1
    out_cf = jax.block_until_ready(
        layer_norm(x_cf, w_cf, b_cf, eps=eps, data_format="channels_first"))
    ref_cf = _reference(x_cf, w_cf, b_cf, eps, "channels_first")
    assert out_cf.shape == x_cf.shape and out_cf.dtype == x_cf.dtype
    assert jnp.allclose(out_cf, ref_cf, atol=atol, rtol=rtol)

    # 2) channels_last: (..., C=32) -> lane-packed kernel (g = 4 rows / vreg row).
    x_cl = jax.random.normal(k2, (2, 8, 32), dtype=jnp.float32)
    w_cl = jax.random.normal(k3, (32,), dtype=jnp.float32)
    b_cl = jax.random.normal(k4, (32,), dtype=jnp.float32) * 0.1
    out_cl = jax.block_until_ready(
        layer_norm(x_cl, w_cl, b_cl, eps=eps, data_format="channels_last"))
    ref_cl = _reference(x_cl, w_cl, b_cl, eps, "channels_last")
    assert out_cl.shape == x_cl.shape and out_cl.dtype == x_cl.dtype
    assert jnp.allclose(out_cl, ref_cl, atol=atol, rtol=rtol)

    # 3) channels_last: C=128 plain kernel, rows=20 with a tiny tile budget to
    #    exercise the cdiv grid + implicit partial last block.
    x_p = jax.random.normal(k3, (4, 5, 128), dtype=jnp.float32)
    w_p = jax.random.normal(k1, (128,), dtype=jnp.float32)
    b_p = jax.random.normal(k2, (128,), dtype=jnp.float32) * 0.1
    out_p = jax.block_until_ready(
        layer_norm(x_p, w_p, b_p, eps=eps, data_format="channels_last",
                   tile_bytes=8 * 128 * 4))
    ref_p = _reference(x_p, w_p, b_p, eps, "channels_last")
    assert out_p.shape == x_p.shape and out_p.dtype == x_p.dtype
    assert jnp.allclose(out_p, ref_p, atol=atol, rtol=rtol)

    # 4) channels_first: H*W=150 (not a multiple of 128) with a tiny tile
    #    budget to exercise the lane-blocked spatial path.
    x_cf2 = jax.random.normal(k4, (2, 8, 10, 15), dtype=jnp.float32)
    w_cf2 = jax.random.normal(k2, (8,), dtype=jnp.float32)
    b_cf2 = jax.random.normal(k1, (8,), dtype=jnp.float32) * 0.1
    out_cf2 = jax.block_until_ready(
        layer_norm(x_cf2, w_cf2, b_cf2, eps=eps, data_format="channels_first",
                   tile_bytes=128 * 8 * 4))
    ref_cf2 = _reference(x_cf2, w_cf2, b_cf2, eps, "channels_first")
    assert out_cf2.shape == x_cf2.shape and out_cf2.dtype == x_cf2.dtype
    assert jnp.allclose(out_cf2, ref_cf2, atol=atol, rtol=rtol)

    # 5) channels_last small-C with rows % g != 0: packed bulk + plain remainder.
    x_r = jax.random.normal(k1, (3, 5, 32), dtype=jnp.float32)   # rows=15, g=4
    w_r = jax.random.normal(k3, (32,), dtype=jnp.float32)
    b_r = jax.random.normal(k2, (32,), dtype=jnp.float32) * 0.1
    out_r = jax.block_until_ready(
        layer_norm(x_r, w_r, b_r, eps=eps, data_format="channels_last"))
    ref_r = _reference(x_r, w_r, b_r, eps, "channels_last")
    assert out_r.shape == x_r.shape and out_r.dtype == x_r.dtype
    assert jnp.allclose(out_r, ref_r, atol=atol, rtol=rtol)

    print("KERNEL_OK")
</pallas_src>

<mosaic_0001>
module attributes {stable_mosaic.version = 11 : i64} {
  func.func @_ln_cf_kernel(%arg0: i32, %arg1: memref<1x4x256xf32, #tpu.memory_space<vmem>>, %arg2: memref<1x4x1xf32, #tpu.memory_space<vmem>>, %arg3: memref<1x4x1xf32, #tpu.memory_space<vmem>>, %arg4: memref<1x4x256xf32, #tpu.memory_space<vmem>>) attributes {dimension_semantics = [#tpu.dimension_semantics<parallel>], iteration_bounds = array<i64: 2>, scalar_prefetch = 0 : i64, scratch_operands = 0 : i64, tpu.core_type = #tpu.core_type<tc>, window_params = [{transform_indices = @transform_0, window_bounds = array<i64: 1, 4, 256>}, {pipeline_mode = #tpu.pipeline_mode<synchronous>, transform_indices = @transform_1, window_bounds = array<i64: 1, 4, 1>}, {pipeline_mode = #tpu.pipeline_mode<synchronous>, transform_indices = @transform_2, window_bounds = array<i64: 1, 4, 1>}, {transform_indices = @transform_3, window_bounds = array<i64: 1, 4, 256>}]} {
    %c0 = arith.constant 0 : index
    %c0_0 = arith.constant 0 : index
    %c0_1 = arith.constant 0 : index
    %0 = vector.load %arg1[%c0, %c0_0, %c0_1] : memref<1x4x256xf32, #tpu.memory_space<vmem>>, vector<1x4x256xf32>
    %cst = arith.constant dense<0.000000e+00> : vector<1x256xf32>
    %1 = vector.multi_reduction <add>, %0, %cst [1] : vector<1x4x256xf32> to vector<1x256xf32>
    %2 = vector.shape_cast %1 : vector<1x256xf32> to vector<1x1x256xf32>
    %cst_2 = arith.constant 2.500000e-01 : f32
    %3 = vector.broadcast %cst_2 : f32 to vector<1x1x256xf32>
    %4 = arith.mulf %2, %3 : vector<1x1x256xf32>
    %5 = vector.broadcast %4 : vector<1x1x256xf32> to vector<1x4x256xf32>
    %6 = arith.subf %0, %5 : vector<1x4x256xf32>
    %7 = arith.mulf %6, %6 : vector<1x4x256xf32>
    %cst_3 = arith.constant dense<0.000000e+00> : vector<1x256xf32>
    %8 = vector.multi_reduction <add>, %7, %cst_3 [1] : vector<1x4x256xf32> to vector<1x256xf32>
    %9 = vector.shape_cast %8 : vector<1x256xf32> to vector<1x1x256xf32>
    %cst_4 = arith.constant 2.500000e-01 : f32
    %10 = vector.broadcast %cst_4 : f32 to vector<1x1x256xf32>
    %11 = arith.mulf %9, %10 : vector<1x1x256xf32>
    %cst_5 = arith.constant 9.99999974E-6 : f32
    %12 = vector.broadcast %cst_5 : f32 to vector<1x1x256xf32>
    %13 = arith.addf %11, %12 : vector<1x1x256xf32>
    %14 = math.rsqrt %13 : vector<1x1x256xf32>
    %15 = vector.broadcast %14 : vector<1x1x256xf32> to vector<1x4x256xf32>
    %16 = arith.mulf %6, %15 : vector<1x4x256xf32>
    %c0_6 = arith.constant 0 : index
    %c0_7 = arith.constant 0 : index
    %c0_8 = arith.constant 0 : index
    %17 = vector.load %arg2[%c0_6, %c0_7, %c0_8] : memref<1x4x1xf32, #tpu.memory_space<vmem>>, vector<1x4x1xf32>
    %18 = vector.broadcast %17 : vector<1x4x1xf32> to vector<1x4x256xf32>
    %19 = arith.mulf %16, %18 : vector<1x4x256xf32>
    %c0_9 = arith.constant 0 : index
    %c0_10 = arith.constant 0 : index
    %c0_11 = arith.constant 0 : index
    %20 = vector.load %arg3[%c0_9, %c0_10, %c0_11] : memref<1x4x1xf32, #tpu.memory_space<vmem>>, vector<1x4x1xf32>
    %21 = vector.broadcast %20 : vector<1x4x1xf32> to vector<1x4x256xf32>
    %22 = arith.addf %19, %21 : vector<1x4x256xf32>
    %c0_12 = arith.constant 0 : index
    %c0_13 = arith.constant 0 : index
    %c0_14 = arith.constant 0 : index
    %23 = vector.load %arg4[%c0_12, %c0_13, %c0_14] : memref<1x4x256xf32, #tpu.memory_space<vmem>>, vector<1x4x256xf32>
    tpu.vector_store %arg4[%c0_12, %c0_13, %c0_14], %22 {strides = array<i32>} : memref<1x4x256xf32, #tpu.memory_space<vmem>>, vector<1x4x256xf32>,
    return
  }
  func.func @transform_0(%arg0: i32) -> (i32, i32, i32) {
    %c0_i32 = arith.constant 0 : i32
    %c0_i32_0 = arith.constant 0 : i32
    %c0_i32_1 = arith.constant 0 : i32
    return %arg0, %c0_i32, %c0_i32_0 : i32, i32, i32
  }
  func.func @transform_1(%arg0: i32) -> (i32, i32, i32) {
    %c0_i32 = arith.constant 0 : i32
    %c0_i32_0 = arith.constant 0 : i32
    %c0_i32_1 = arith.constant 0 : i32
    %c0_i32_2 = arith.constant 0 : i32
    return %c0_i32, %c0_i32_0, %c0_i32_1 : i32, i32, i32
  }
  func.func @transform_2(%arg0: i32) -> (i32, i32, i32) {
    %c0_i32 = arith.constant 0 : i32
    %c0_i32_0 = arith.constant 0 : i32
    %c0_i32_1 = arith.constant 0 : i32
    %c0_i32_2 = arith.constant 0 : i32
    return %c0_i32, %c0_i32_0, %c0_i32_1 : i32, i32, i32
  }
  func.func @transform_3(%arg0: i32) -> (i32, i32, i32) {
    %c0_i32 = arith.constant 0 : i32
    %c0_i32_0 = arith.constant 0 : i32
    %c0_i32_1 = arith.constant 0 : i32
    return %arg0, %c0_i32, %c0_i32_0 : i32, i32, i32
  }
}

</mosaic_0001>

<llo_original>
// kernel: tpu_custom_call.1
$region0: #{tpu_custom_call.1}
  #allocation0 [shape = 'u32[]', space=smem, size = 0x4, offset = 0x4, fixed_abs, tag = 'smem constant byte address 0x4 - core index']
  #allocation1 [shape = 'u32[144,128]{1,0:T(1,128)}', space=vmem, size = 0x12000, scoped, tag = 'internal scratch']
  %s0 = inlined_call_operand.hbm [shape: f32[2,4,256], index: 0, kind: input, shape index: {}]
  %s1 = inlined_call_operand.vmem [shape: f32[1,4,1], index: 1, kind: input, shape index: {}]
  %s2 = inlined_call_operand.vmem [shape: f32[1,4,1], index: 2, kind: input, shape index: {}]
  %s3 = inlined_call_operand.hbm [shape: f32[2,4,256], index: 3, kind: output, shape index: {}]
  %s4 = sld [smem:[#allocation0]]
  $region49: #{tpu_custom_call.1} parent=0
    _
  %s6 = ssub.s32 1, %s4
  %s7 = scalar_select 0, %s6, %s4
  $region1: #{tpu_custom_call.1} parent=0
    #allocation2 [shape = 'u8[8192]{0}', space=vmem, size = 0x2000, scoped, tag = 'input window, operand 0']
    #allocation3 [shape = 's32[2]{0}', space=sflag, size = 0x8, scoped, tag = 'scoped memory for tpu_custom_call.1']
    #allocation4 [shape = 's32[2]{0}', space=sflag, size = 0x8, scoped, tag = 'scoped memory for tpu_custom_call.1']
    #allocation5 [shape = 'u8[8192]{0}', space=vmem, size = 0x2000, scoped, tag = 'output window, operand 0']
    %8 = vsyncpa [#allocation3], 0
    %s9 = scalar_lea.sflag [#allocation3], 1
    %10 = vsyncpa %s9, 0
    %11 = vsyncpa [#allocation4], 0
    %s12 = scalar_lea.sflag [#allocation4], 1
    %13 = vsyncpa %s12, 0
    loop: start=0, step=1, limit=4
    $region2: #{tpu_custom_call.1} parent=1 // loop_pre_header
      _
    $region3: #{tpu_custom_call.1} parent=1 // loop_header
      %s15 = sphi 0, %s19
      %p16 = scmp.ge.s32.totalorder %s15, 4
      %s25 = sphi 0, %s27
      %s28 = sphi 0, %s25
      %s29 = sphi 0, %s28
      %s45 = sphi 0, %s29
      %s49 = sphi 0, %s49
      %s51 = sphi 0, %s49
      %s52 = sphi 0, %s51
      %s66 = sphi 0, %s52
      %s70 = sphi 0, %s70
      %s72 = sphi 0, %s70
      %s73 = sphi 0, %s72
      %s87 = sphi 0, %s73
      %s93 = sphi 0, %s95
      %s96 = sphi 0, %s93
      %s97 = sphi 0, %s96
      %s113 = sphi 0, %s97
    $region4: #{tpu_custom_call.1} parent=1 // loop_header_branch
      %18 = sbr.rel (%p16) target = $region8
    $region5: #{tpu_custom_call.1} parent=1 // loop_body
      %s20 = ssub.s32 %s15, 1
      %s21 = ssub.s32 %s15, 2
      %s22 = sadd.s32 %s15, 1
      %s23 = ssub.s32 %s15, %s22
      %p24 = scmp.eq.s32.totalorder %s23, 0
      %s26 = sadd.s32 %s25, 1
      %s27 = scalar_select %p24, %s25, %s26
      %p30 = pneg %p24
      %p31 = scmp.eq.s32.totalorder %s15, 1
      %p32 = por %p30, %p31
      %p33 = scmp.ne.s32.totalorder %s25, %s28
      %p34 = scmp.eq.s32.totalorder %s15, 0
      %p35 = por %p33, %p34
      %p36 = scmp.ne.s32.totalorder %s25, %s28
      %p37 = scmp.eq.s32.totalorder %s20, 1
      %p38 = por %p36, %p37
      %p39 = scmp.ne.s32.totalorder %s28, %s29
      %p40 = scmp.eq.s32.totalorder %s20, 0
      %p41 = por %p39, %p40
      %p42 = scmp.ne.s32.totalorder %s28, %s29
      %p43 = scmp.eq.s32.totalorder %s21, 1
      %p44 = por %p42, %p43
      %p46 = scmp.ne.s32.totalorder %s29, %s45
      %p47 = scmp.eq.s32.totalorder %s21, 0
      %p48 = por %p46, %p47
      %s50 = sadd.s32 %s49, 1
      %p53 = scmp.eq.s32.totalorder %s15, 1
      %p54 = scmp.ne.s32.totalorder %s49, %s51
      %p55 = scmp.eq.s32.totalorder %s15, 0
      %p56 = por %p54, %p55
      %p57 = scmp.ne.s32.totalorder %s49, %s51
      %p58 = scmp.eq.s32.totalorder %s20, 1
      %p59 = por %p57, %p58
      %p60 = scmp.ne.s32.totalorder %s51, %s52
      %p61 = scmp.eq.s32.totalorder %s20, 0
      %p62 = por %p60, %p61
      %p63 = scmp.ne.s32.totalorder %s51, %s52
      %p64 = scmp.eq.s32.totalorder %s21, 1
      %p65 = por %p63, %p64
      %p67 = scmp.ne.s32.totalorder %s52, %s66
      %p68 = scmp.eq.s32.totalorder %s21, 0
      %p69 = por %p67, %p68
      %s71 = sadd.s32 %s70, 1
      %p74 = scmp.eq.s32.totalorder %s15, 1
      %p75 = scmp.ne.s32.totalorder %s70, %s72
      %p76 = scmp.eq.s32.totalorder %s15, 0
      %p77 = por %p75, %p76
      %p78 = scmp.ne.s32.totalorder %s70, %s72
      %p79 = scmp.eq.s32.totalorder %s20, 1
      %p80 = por %p78, %p79
      %p81 = scmp.ne.s32.totalorder %s72, %s73
      %p82 = scmp.eq.s32.totalorder %s20, 0
      %p83 = por %p81, %p82
      %p84 = scmp.ne.s32.totalorder %s72, %s73
      %p85 = scmp.eq.s32.totalorder %s21, 1
      %p86 = por %p84, %p85
      %p88 = scmp.ne.s32.totalorder %s73, %s87
      %p89 = scmp.eq.s32.totalorder %s21, 0
      %p90 = por %p88, %p89
      %s91 = ssub.s32 %s15, %s22
      %p92 = scmp.eq.s32.totalorder %s91, 0
      %s94 = sadd.s32 %s93, 1
      %s95 = scalar_select %p92, %s93, %s94
      %p98 = pneg %p92
      %p99 = scmp.eq.s32.totalorder %s15, 1
      %p100 = por %p98, %p99
      %p101 = scmp.ne.s32.totalorder %s93, %s96
      %p102 = scmp.eq.s32.totalorder %s15, 0
      %p103 = por %p101, %p102
      %p104 = scmp.ne.s32.totalorder %s93, %s96
      %p105 = scmp.eq.s32.totalorder %s20, 1
      %p106 = por %p104, %p105
      %p107 = scmp.ne.s32.totalorder %s96, %s97
      %p108 = scmp.eq.s32.totalorder %s20, 0
      %p109 = por %p107, %p108
      %p110 = scmp.ne.s32.totalorder %s96, %s97
      %p111 = scmp.eq.s32.totalorder %s21, 1
      %p112 = por %p110, %p111
      %p114 = scmp.ne.s32.totalorder %s97, %s113
      %p115 = scmp.eq.s32.totalorder %s21, 0
      %p116 = por %p114, %p115
      %p117 = scmp.le.s32.totalorder 1, %s15
      %p118 = scmp.lt.s32.totalorder %s15, 3
      %p119 = pnand %p117, %p118
      %p120 = pneg %p119
      // Predicated region
      $region9: #{tpu_custom_call.1} parent=5 // pred_check
        _
      $region10: #{tpu_custom_call.1} parent=5 // pred_check_branch
        %122 = sbr.rel (%p119) target = $region12
      $region11: #{tpu_custom_call.1} parent=5 // pred_region
        %s123 = ssub.s32 %s15, 1
        // Predicated region
        $region13: #{tpu_custom_call.1} parent=11 // pred_check
          %p124 = pneg %p62
        $region14: #{tpu_custom_call.1} parent=11 // pred_check_branch
          %126 = sbr.rel (%p124) target = $region16
        $region15: #{tpu_custom_call.1} parent=11 // pred_region
          _
        $region16: #{tpu_custom_call.1} parent=11 // pred_fallthru
          _
        // Predicated region
        $region17: #{tpu_custom_call.1} parent=11 // pred_check
          %p127 = pneg %p83
        $region18: #{tpu_custom_call.1} parent=11 // pred_check_branch
          %129 = sbr.rel (%p127) target = $region20
        $region19: #{tpu_custom_call.1} parent=11 // pred_region
          _
        $region20: #{tpu_custom_call.1} parent=11 // pred_fallthru
          _
      $region12: #{tpu_custom_call.1} parent=5 // pred_fallthru
        _
      %p130 = scmp.lt.s32.totalorder %s15, 2
      // Predicated region
      $region21: #{tpu_custom_call.1} parent=5 // pred_check
        %p131 = pneg %p130
      $region22: #{tpu_custom_call.1} parent=5 // pred_check_branch
        %133 = sbr.rel (%p131) target = $region24
      $region23: #{tpu_custom_call.1} parent=5 // pred_region
        // Predicated region
        $region25: #{tpu_custom_call.1} parent=23 // pred_check
          %p134 = pneg %p35
        $region26: #{tpu_custom_call.1} parent=23 // pred_check_branch
          %136 = sbr.rel (%p134) target = $region28
        $region27: #{tpu_custom_call.1} parent=23 // pred_region
          %s137 = sand.u32 %s25, 1
          %s138 = scalar_lea.sflag [#allocation3], %s137
          %s139 = sand.u32 %s25, 1
          %s140 = smul.addr %s139, 8
          %s141 = scalar_lea.vmem [#allocation2], %s140
          %s143 = ssub.s32 128, 128
          %144 = vsyncadd %s138, %s143
          %s145 = smul.addr %s15, 2
          %s146 = smul.addr %s145, 64
          %s147 = scalar_lea.hbm %s0, %s146
          %s149 = sshll.u32 %s141, 4
          %s150 = int_to_ptr.vmem [resolvable:$true] %s149
          %152 = dma.hbm_to_vmem [thread:$0]  %s147, 128, %s150, %s138
        $region28: #{tpu_custom_call.1} parent=23 // pred_fallthru
          _
      $region24: #{tpu_custom_call.1} parent=5 // pred_fallthru
        _
      %p153 = scmp.le.s32.totalorder 1, %s15
      %p154 = scmp.lt.s32.totalorder %s15, 3
      %p155 = pnand %p153, %p154
      %p156 = pneg %p155
      // Predicated region
      $region29: #{tpu_custom_call.1} parent=5 // pred_check
        _
      $region30: #{tpu_custom_call.1} parent=5 // pred_check_branch
        %158 = sbr.rel (%p155) target = $region32
      $region31: #{tpu_custom_call.1} parent=5 // pred_region
        %s159 = ssub.s32 %s15, 1
        %s160 = sand.u32 %s28, 1
        %s161 = scalar_lea.sflag [#allocation3], %s160
        %s162 = sand.u32 %s28, 1
        %s163 = smul.addr %s162, 8
        %s164 = scalar_lea.vmem [#allocation2], %s163
        // Predicated region
        $region33: #{tpu_custom_call.1} parent=31 // pred_check
          %p165 = pneg %p41
        $region34: #{tpu_custom_call.1} parent=31 // pred_check_branch
          %167 = sbr.rel (%p165) target = $region36
        $region35: #{tpu_custom_call.1} parent=31 // pred_region
          %168 = dma.done %s161, 128
        $region36: #{tpu_custom_call.1} parent=31 // pred_fallthru
          _
        %s169 = sand.u32 %s28, 1
        %s170 = scalar_lea.sflag [#allocation3], %s169
        %s171 = sand.u32 %s28, 1
        %s172 = smul.addr %s171, 8
        %s173 = scalar_lea.vmem [#allocation2], %s172
        %p174 = pneg %p41
        %p175 = pneg %p38
        %p176 = pneg %p62
        %p177 = pneg %p59
        %p178 = pneg %p83
        %p179 = pneg %p80
        %p180 = pneg %p109
        %p181 = pneg %p106
        %s182 = sand.u32 %s96, 1
        %s183 = scalar_lea.sflag [#allocation4], %s182
        %s184 = sand.u32 %s96, 1
        %s185 = smul.addr %s184, 8
        %s186 = scalar_lea.vmem [#allocation5], %s185
        %v187 = vld [vmem:[%s164] sm:$0xff]
        %v189 = vcombine.high %v187, %v187
        %vm191 = vcmask 1043456
        %v192 = vsel %vm191, %v187, 0.0
        %v193 = vrot.slane %v192, 4
        %v194 = vadd.f32 %v192, %v193
        %v195 = vrot.slane %v194, 2
        %v196 = vadd.f32 %v194, %v195
        %v197 = vrot.slane %v196, 1
        %v198 = vadd.f32 %v196, %v197
        %v199 = vsel %vm191, %v189, 0.0
        %v200 = vrot.slane %v199, 4
        %v201 = vadd.f32 %v199, %v200
        %v202 = vrot.slane %v201, 2
        %v203 = vadd.f32 %v201, %v202
        %v204 = vrot.slane %v203, 1
        %v205 = vadd.f32 %v203, %v204
        %v206 = vmul.f32 %v198, 0.25
        %v207 = vmul.f32 %v205, 0.25
        %v210 = vcombine.low %v206, %v207
        %v212 = vsub.f32 %v187, %v210
        %v213 = vmul.f32 %v212, %v212
        %v215 = vcombine.high %v213, %v213
        %v217 = vsel %vm191, %v213, 0.0
        %v218 = vrot.slane %v217, 4
        %v219 = vadd.f32 %v217, %v218
        %v220 = vrot.slane %v219, 2
        %v221 = vadd.f32 %v219, %v220
        %v222 = vrot.slane %v221, 1
        %v223 = vadd.f32 %v221, %v222
        %v224 = vsel %vm191, %v215, 0.0
        %v225 = vrot.slane %v224, 4
        %v226 = vadd.f32 %v224, %v225
        %v227 = vrot.slane %v226, 2
        %v228 = vadd.f32 %v226, %v227
        %v229 = vrot.slane %v228, 1
        %v230 = vadd.f32 %v228, %v229
        %v231 = vmul.f32 %v223, 0.25
        %v232 = vmul.f32 %v230, 0.25
        %v233 = vadd.f32 %v231, 1e-05
        %v234 = vadd.f32 %v232, 1e-05
        %v235 = vrsqrt.pop %v233
        %v236 = vrsqrt.pop %v234
        %v239 = vcombine.low %v235, %v236
        %v241 = vmul.f32 %v212, %v239
        %v242 = vld [vmem:[%s1] sm:$0xf]
        %244 = vset.pattern.permute.xlu0 0
        %245 = vperm.xlu0 %244, %v242
        %v246 = vpop.permute.xlu0 %245
        %v248 = vunpack.c.l.s4 839922192
        %v249 = vunpack.c.0.s8 %v248
        %v250 = vlaneseq
        %v251 = vshrl.u32 %v250, 7
        %v252 = vsub.s32 %v249, %v251
        %v253 = vrot.slane %v246, %v252
        %v255 = vmul.f32 %v241, %v253
        %v256 = vld [vmem:[%s2] sm:$0xf]
        %258 = vset.pattern.permute.xlu0 0
        %259 = vperm.xlu0 %258, %v256
        %v260 = vpop.permute.xlu0 %259
        %v262 = vunpack.c.l.s4 839922192
        %v263 = vunpack.c.0.s8 %v262
        %v264 = vlaneseq
        %v265 = vshrl.u32 %v264, 7
        %v266 = vsub.s32 %v263, %v265
        %v267 = vrot.slane %v260, %v266
        %v269 = vadd.f32 %v255, %v267
        %270 = vst [vmem:[%s186] sm:$0xff] %v269
        %s271 = sand.u32 %s96, 1
        %s272 = scalar_lea.sflag [#allocation4], %s271
        %s273 = sand.u32 %s96, 1
        %s274 = smul.addr %s273, 8
        %s275 = scalar_lea.vmem [#allocation5], %s274
        // Predicated region
        $region37: #{tpu_custom_call.1} parent=31 // pred_check
          %p276 = pneg %p106
        $region38: #{tpu_custom_call.1} parent=31 // pred_check_branch
          %278 = sbr.rel (%p276) target = $region40
        $region39: #{tpu_custom_call.1} parent=31 // pred_region
          %s280 = ssub.s32 128, 128
          %281 = vsyncadd %s272, %s280
          %s282 = smul.addr %s20, 2
          %s283 = smul.addr %s282, 64
          %s284 = scalar_lea.hbm %s3, %s283
          %s286 = sshll.u32 %s275, 4
          %s287 = int_to_ptr.vmem [resolvable:$true] %s286
          %289 = dma.vmem_to_hbm [thread:$0]  %s287, 128, %s284, %s272
        $region40: #{tpu_custom_call.1} parent=31 // pred_fallthru
          _
      $region32: #{tpu_custom_call.1} parent=5 // pred_fallthru
        _
      %p290 = scmp.le.s32.totalorder 2, %s15
      // Predicated region
      $region41: #{tpu_custom_call.1} parent=5 // pred_check
        %p291 = pneg %p290
      $region42: #{tpu_custom_call.1} parent=5 // pred_check_branch
        %293 = sbr.rel (%p291) target = $region44
      $region43: #{tpu_custom_call.1} parent=5 // pred_region
        %s294 = ssub.s32 %s15, 2
        // Predicated region
        $region45: #{tpu_custom_call.1} parent=43 // pred_check
          %p295 = pneg %p112
        $region46: #{tpu_custom_call.1} parent=43 // pred_check_branch
          %297 = sbr.rel (%p295) target = $region48
        $region47: #{tpu_custom_call.1} parent=43 // pred_region
          %s298 = sand.u32 %s97, 1
          %s299 = scalar_lea.sflag [#allocation4], %s298
          %s300 = sand.u32 %s97, 1
          %s301 = smul.addr %s300, 8
          %s302 = scalar_lea.vmem [#allocation5], %s301
          %303 = dma.done %s299, 128
        $region48: #{tpu_custom_call.1} parent=43 // pred_fallthru
          _
      $region44: #{tpu_custom_call.1} parent=5 // pred_fallthru
        _
    $region6: #{tpu_custom_call.1} parent=1 // loop_footer
      %s19 = sadd.s32 1, %s15
    $region7: #{tpu_custom_call.1} parent=1 // loop_footer_branch
      %14 = sbr.rel target = $region3
    $region8: #{tpu_custom_call.1} parent=1 // loop_exit
      _
    %304 = vsyncpa [#allocation3], 1
    %s305 = scalar_lea.sflag [#allocation3], 1
    %306 = vsyncpa %s305, 1
    %307 = vsyncpa [#allocation4], 1
    %s308 = scalar_lea.sflag [#allocation4], 1
    %309 = vsyncpa %s308, 1

</llo_original>
